<compile_context>
chip_gen: v7x
topology: tpu7x:2x2x1
jax: 0.10.0
libtpu: 0.0.40
codegen_flags: <defaults>
</compile_context>

<pallas_src>
import jax
import jax.numpy as jnp
from jax.experimental import pallas as pl
from jax.experimental.pallas import tpu as pltpu

VOCAB = 101
HIDDEN = 128
NUM_LAYERS = 4        # config.num_hidden_layers (small synthetic value)
NUM_OUTPUTS = 2       # module's num_outputs


# --------------------------------------------------------------------------
# Fused forward kernel: embedding-mask -> 4 encoder layers -> both scalar
# mixes, all in one grid step with everything resident on-chip.
# --------------------------------------------------------------------------
def _fused_forward_kernel(nw_ref, g_ref, emb_ref, mask_ref, w_ref, b_ref, o_ref):
    """Single-step fused forward.

    nw_ref   [NUM_OUTPUTS, L]     SMEM  softmax-normalised layer weights
    g_ref    [NUM_OUTPUTS]        SMEM  gamma
    emb_ref  [M, H]               VMEM  gathered token embeddings (pre-mask)
    mask_ref [M, H]               VMEM  attention mask, pre-broadcast to lanes
    w_ref    [L, H, H]            VMEM  per-layer weights
    b_ref    [L, 1, H]            VMEM  per-layer bias
    o_ref    [NUM_OUTPUTS, M, H]  VMEM  both mixed-embedding outputs
    """
    mask = mask_ref[...]
    h = emb_ref[...] * mask            # hidden_states[0] (masked embedding out)

    # Scalar-mix accumulators for both outputs, kept as values (a few vregs).
    acc = [jnp.zeros(h.shape, jnp.float32) for _ in range(NUM_OUTPUTS)]

    # Static unroll over the L synthetic encoder layers.  The scalar mix uses
    # hidden_states[-L:], i.e. the output of each layer, accumulated on the
    # fly so the [L, M, H] stack never exists.
    for l in range(NUM_LAYERS):
        y = jnp.dot(h, w_ref[l], preferred_element_type=jnp.float32)
        h = (jnp.tanh(y + b_ref[l]) + h) * mask
        for i in range(NUM_OUTPUTS):
            acc[i] = acc[i] + nw_ref[i, l] * h

    for i in range(NUM_OUTPUTS):
        o_ref[i] = g_ref[i] * acc[i]


def mixed_bert_embedding_forward(word_ids, attention_mask, params):
    B, S = word_ids.shape
    M = B * S

    # Embedding lookup stays as a (tiny) XLA gather; the mask multiply is done
    # inside the fused kernel.
    # TODO(synk): fold the gather into the kernel (scalar-prefetched word_ids
    # + per-row DMA from an HBM-resident table) when scaling to a real vocab.
    emb = jnp.take(params["embedding"], word_ids.reshape(M), axis=0)

    # Pre-broadcast the mask to full lane width once.
    mask2d = jnp.broadcast_to(
        attention_mask.reshape(M, 1).astype(jnp.float32), (M, HIDDEN))

    # softmax over the L scalar layer-weights, for both outputs at once (glue).
    normed_w = jax.nn.softmax(params["weights"], axis=-1)   # [NUM_OUTPUTS, L]
    gamma = params["gamma"].reshape(NUM_OUTPUTS)             # [NUM_OUTPUTS]

    cost = pl.CostEstimate(
        flops=2 * M * HIDDEN * HIDDEN * NUM_LAYERS,
        transcendentals=M * HIDDEN * NUM_LAYERS,
        bytes_accessed=4 * (emb.size + mask2d.size
                            + params["layer_w"].size + params["layer_b"].size
                            + NUM_OUTPUTS * M * HIDDEN),
    )

    mixed = pl.pallas_call(
        _fused_forward_kernel,
        out_shape=jax.ShapeDtypeStruct((NUM_OUTPUTS, M, HIDDEN), jnp.float32),
        in_specs=[
            pl.BlockSpec(memory_space=pltpu.MemorySpace.SMEM),   # normed weights
            pl.BlockSpec(memory_space=pltpu.MemorySpace.SMEM),   # gamma
            pl.BlockSpec(memory_space=pltpu.MemorySpace.VMEM),   # embeddings
            pl.BlockSpec(memory_space=pltpu.MemorySpace.VMEM),   # mask (M, H)
            pl.BlockSpec(memory_space=pltpu.MemorySpace.VMEM),   # layer weights
            pl.BlockSpec(memory_space=pltpu.MemorySpace.VMEM),   # layer bias
        ],
        out_specs=pl.BlockSpec(memory_space=pltpu.MemorySpace.VMEM),
        cost_estimate=cost,
    )(normed_w, gamma, emb, mask2d, params["layer_w"], params["layer_b"])

    return [mixed[i].reshape(B, S, HIDDEN) for i in range(NUM_OUTPUTS)]


# --------------------------------------------------------------------------
# Pure-JAX reference (mirrors the module's forward semantics).
# --------------------------------------------------------------------------
def reference_forward(word_ids, attention_mask, params):
    B, S = word_ids.shape
    M = B * S
    mask = attention_mask.reshape(M, 1).astype(jnp.float32)
    h = jnp.take(params["embedding"], word_ids.reshape(M), axis=0) * mask
    hidden_states = [h]
    for l in range(NUM_LAYERS):
        y = jnp.tanh(h @ params["layer_w"][l] + params["layer_b"][l]) + h
        h = y * mask
        hidden_states.append(h)
    hs = jnp.stack(hidden_states[-NUM_LAYERS:], axis=0)
    outs = []
    for i in range(NUM_OUTPUTS):
        nw = jax.nn.softmax(params["weights"][i])
        mixed = params["gamma"][i] * jnp.einsum("l,lmh->mh", nw, hs)
        outs.append(mixed.reshape(B, S, HIDDEN))
    return outs


if __name__ == "__main__":
    key = jax.random.PRNGKey(0)
    k_emb, k_w, k_b, k_lw, k_g, k_ids = jax.random.split(key, 6)

    # Deterministic synthetic parameters (shapes follow the module's __init__:
    # gamma: num_outputs x [1]; weights: num_outputs x num_hidden_layers x [1]).
    params = {
        "embedding": jax.random.normal(k_emb, (VOCAB, HIDDEN), jnp.float32) * 0.1,
        "layer_w": jax.random.normal(k_w, (NUM_LAYERS, HIDDEN, HIDDEN), jnp.float32) * 0.05,
        "layer_b": jax.random.normal(k_b, (NUM_LAYERS, 1, HIDDEN), jnp.float32) * 0.01,
        "weights": jax.random.normal(k_lw, (NUM_OUTPUTS, NUM_LAYERS), jnp.float32),
        "gamma": jax.random.normal(k_g, (NUM_OUTPUTS, 1), jnp.float32),
    }

    B, S = 2, 8
    word_ids = jax.random.randint(k_ids, (B, S), 0, VOCAB, dtype=jnp.int32)
    attention_mask = jnp.ones((B, S), jnp.int32).at[1, 6:].set(0)

    outs = mixed_bert_embedding_forward(word_ids, attention_mask, params)
    outs = [jax.block_until_ready(o) for o in outs]

    refs = reference_forward(word_ids, attention_mask, params)
    for o, r in zip(outs, refs):
        assert o.shape == (B, S, HIDDEN)
        assert jnp.allclose(o, r, atol=1e-5, rtol=1e-5), "mismatch vs reference"

    print("KERNEL_OK")
</pallas_src>

<mosaic_0001>
module attributes {stable_mosaic.version = 11 : i64} {
  func.func @_fused_forward_kernel(%arg0: memref<2x4xf32, #tpu.memory_space<smem>>, %arg1: memref<2xf32, #tpu.memory_space<smem>>, %arg2: memref<16x128xf32, #tpu.memory_space<vmem>>, %arg3: memref<16x128xf32, #tpu.memory_space<vmem>>, %arg4: memref<4x128x128xf32, #tpu.memory_space<vmem>>, %arg5: memref<4x1x128xf32, #tpu.memory_space<vmem>>, %arg6: memref<2x16x128xf32, #tpu.memory_space<vmem>>) attributes {dimension_semantics = [], scalar_prefetch = 0 : i64, scratch_operands = 0 : i64, tpu.core_type = #tpu.core_type<tc>} {
    %c0 = arith.constant 0 : index
    %c0_0 = arith.constant 0 : index
    %0 = vector.load %arg3[%c0, %c0_0] : memref<16x128xf32, #tpu.memory_space<vmem>>, vector<16x128xf32>
    %c0_1 = arith.constant 0 : index
    %c0_2 = arith.constant 0 : index
    %1 = vector.load %arg2[%c0_1, %c0_2] : memref<16x128xf32, #tpu.memory_space<vmem>>, vector<16x128xf32>
    %2 = arith.mulf %1, %0 : vector<16x128xf32>
    %cst = arith.constant 0.000000e+00 : f32
    %3 = vector.broadcast %cst : f32 to vector<16x128xf32>
    %cst_3 = arith.constant 0.000000e+00 : f32
    %4 = vector.broadcast %cst_3 : f32 to vector<16x128xf32>
    %c0_4 = arith.constant 0 : index
    %c0_5 = arith.constant 0 : index
    %c0_6 = arith.constant 0 : index
    %5 = vector.load %arg4[%c0_4, %c0_5, %c0_6] : memref<4x128x128xf32, #tpu.memory_space<vmem>>, vector<1x128x128xf32>
    %6 = vector.shape_cast %5 : vector<1x128x128xf32> to vector<128x128xf32>
    %cst_7 = arith.constant dense<0.000000e+00> : vector<16x128xf32>
    %7 = tpu.matmul %2, %6, %cst_7 {dimension_numbers = #tpu.dot_dimension_numbers<[1], [0], [0], [1], [0, 0, 1, 1], [], []>} : vector<16x128xf32>, vector<128x128xf32>, vector<16x128xf32> -> vector<16x128xf32>
    %c0_8 = arith.constant 0 : index
    %c0_9 = arith.constant 0 : index
    %c0_10 = arith.constant 0 : index
    %8 = vector.load %arg5[%c0_8, %c0_9, %c0_10] : memref<4x1x128xf32, #tpu.memory_space<vmem>>, vector<1x1x128xf32>
    %9 = vector.shape_cast %8 : vector<1x1x128xf32> to vector<1x128xf32>
    %10 = vector.broadcast %9 : vector<1x128xf32> to vector<16x128xf32>
    %11 = arith.addf %7, %10 : vector<16x128xf32>
    %12 = math.tanh %11 : vector<16x128xf32>
    %13 = arith.addf %12, %2 : vector<16x128xf32>
    %14 = arith.mulf %13, %0 : vector<16x128xf32>
    %c0_11 = arith.constant 0 : index
    %c0_12 = arith.constant 0 : index
    %15 = memref.load %arg0[%c0_11, %c0_12] : memref<2x4xf32, #tpu.memory_space<smem>>
    %16 = vector.broadcast %15 : f32 to vector<16x128xf32>
    %17 = arith.mulf %16, %14 : vector<16x128xf32>
    %18 = arith.addf %3, %17 : vector<16x128xf32>
    %c1 = arith.constant 1 : index
    %c0_13 = arith.constant 0 : index
    %19 = memref.load %arg0[%c1, %c0_13] : memref<2x4xf32, #tpu.memory_space<smem>>
    %20 = vector.broadcast %19 : f32 to vector<16x128xf32>
    %21 = arith.mulf %20, %14 : vector<16x128xf32>
    %22 = arith.addf %4, %21 : vector<16x128xf32>
    %c1_14 = arith.constant 1 : index
    %c0_15 = arith.constant 0 : index
    %c0_16 = arith.constant 0 : index
    %23 = vector.load %arg4[%c1_14, %c0_15, %c0_16] : memref<4x128x128xf32, #tpu.memory_space<vmem>>, vector<1x128x128xf32>
    %24 = vector.shape_cast %23 : vector<1x128x128xf32> to vector<128x128xf32>
    %cst_17 = arith.constant dense<0.000000e+00> : vector<16x128xf32>
    %25 = tpu.matmul %14, %24, %cst_17 {dimension_numbers = #tpu.dot_dimension_numbers<[1], [0], [0], [1], [0, 0, 1, 1], [], []>} : vector<16x128xf32>, vector<128x128xf32>, vector<16x128xf32> -> vector<16x128xf32>
    %c1_18 = arith.constant 1 : index
    %c0_19 = arith.constant 0 : index
    %c0_20 = arith.constant 0 : index
    %26 = vector.load %arg5[%c1_18, %c0_19, %c0_20] : memref<4x1x128xf32, #tpu.memory_space<vmem>>, vector<1x1x128xf32>
    %27 = vector.shape_cast %26 : vector<1x1x128xf32> to vector<1x128xf32>
    %28 = vector.broadcast %27 : vector<1x128xf32> to vector<16x128xf32>
    %29 = arith.addf %25, %28 : vector<16x128xf32>
    %30 = math.tanh %29 : vector<16x128xf32>
    %31 = arith.addf %30, %14 : vector<16x128xf32>
    %32 = arith.mulf %31, %0 : vector<16x128xf32>
    %c0_21 = arith.constant 0 : index
    %c1_22 = arith.constant 1 : index
    %33 = memref.load %arg0[%c0_21, %c1_22] : memref<2x4xf32, #tpu.memory_space<smem>>
    %34 = vector.broadcast %33 : f32 to vector<16x128xf32>
    %35 = arith.mulf %34, %32 : vector<16x128xf32>
    %36 = arith.addf %18, %35 : vector<16x128xf32>
    %c1_23 = arith.constant 1 : index
    %c1_24 = arith.constant 1 : index
    %37 = memref.load %arg0[%c1_23, %c1_24] : memref<2x4xf32, #tpu.memory_space<smem>>
    %38 = vector.broadcast %37 : f32 to vector<16x128xf32>
    %39 = arith.mulf %38, %32 : vector<16x128xf32>
    %40 = arith.addf %22, %39 : vector<16x128xf32>
    %c2 = arith.constant 2 : index
    %c0_25 = arith.constant 0 : index
    %c0_26 = arith.constant 0 : index
    %41 = vector.load %arg4[%c2, %c0_25, %c0_26] : memref<4x128x128xf32, #tpu.memory_space<vmem>>, vector<1x128x128xf32>
    %42 = vector.shape_cast %41 : vector<1x128x128xf32> to vector<128x128xf32>
    %cst_27 = arith.constant dense<0.000000e+00> : vector<16x128xf32>
    %43 = tpu.matmul %32, %42, %cst_27 {dimension_numbers = #tpu.dot_dimension_numbers<[1], [0], [0], [1], [0, 0, 1, 1], [], []>} : vector<16x128xf32>, vector<128x128xf32>, vector<16x128xf32> -> vector<16x128xf32>
    %c2_28 = arith.constant 2 : index
    %c0_29 = arith.constant 0 : index
    %c0_30 = arith.constant 0 : index
    %44 = vector.load %arg5[%c2_28, %c0_29, %c0_30] : memref<4x1x128xf32, #tpu.memory_space<vmem>>, vector<1x1x128xf32>
    %45 = vector.shape_cast %44 : vector<1x1x128xf32> to vector<1x128xf32>
    %46 = vector.broadcast %45 : vector<1x128xf32> to vector<16x128xf32>
    %47 = arith.addf %43, %46 : vector<16x128xf32>
    %48 = math.tanh %47 : vector<16x128xf32>
    %49 = arith.addf %48, %32 : vector<16x128xf32>
    %50 = arith.mulf %49, %0 : vector<16x128xf32>
    %c0_31 = arith.constant 0 : index
    %c2_32 = arith.constant 2 : index
    %51 = memref.load %arg0[%c0_31, %c2_32] : memref<2x4xf32, #tpu.memory_space<smem>>
    %52 = vector.broadcast %51 : f32 to vector<16x128xf32>
    %53 = arith.mulf %52, %50 : vector<16x128xf32>
    %54 = arith.addf %36, %53 : vector<16x128xf32>
    %c1_33 = arith.constant 1 : index
    %c2_34 = arith.constant 2 : index
    %55 = memref.load %arg0[%c1_33, %c2_34] : memref<2x4xf32, #tpu.memory_space<smem>>
    %56 = vector.broadcast %55 : f32 to vector<16x128xf32>
    %57 = arith.mulf %56, %50 : vector<16x128xf32>
    %58 = arith.addf %40, %57 : vector<16x128xf32>
    %c3 = arith.constant 3 : index
    %c0_35 = arith.constant 0 : index
    %c0_36 = arith.constant 0 : index
    %59 = vector.load %arg4[%c3, %c0_35, %c0_36] : memref<4x128x128xf32, #tpu.memory_space<vmem>>, vector<1x128x128xf32>
    %60 = vector.shape_cast %59 : vector<1x128x128xf32> to vector<128x128xf32>
    %cst_37 = arith.constant dense<0.000000e+00> : vector<16x128xf32>
    %61 = tpu.matmul %50, %60, %cst_37 {dimension_numbers = #tpu.dot_dimension_numbers<[1], [0], [0], [1], [0, 0, 1, 1], [], []>} : vector<16x128xf32>, vector<128x128xf32>, vector<16x128xf32> -> vector<16x128xf32>
    %c3_38 = arith.constant 3 : index
    %c0_39 = arith.constant 0 : index
    %c0_40 = arith.constant 0 : index
    %62 = vector.load %arg5[%c3_38, %c0_39, %c0_40] : memref<4x1x128xf32, #tpu.memory_space<vmem>>, vector<1x1x128xf32>
    %63 = vector.shape_cast %62 : vector<1x1x128xf32> to vector<1x128xf32>
    %64 = vector.broadcast %63 : vector<1x128xf32> to vector<16x128xf32>
    %65 = arith.addf %61, %64 : vector<16x128xf32>
    %66 = math.tanh %65 : vector<16x128xf32>
    %67 = arith.addf %66, %50 : vector<16x128xf32>
    %68 = arith.mulf %67, %0 : vector<16x128xf32>
    %c0_41 = arith.constant 0 : index
    %c3_42 = arith.constant 3 : index
    %69 = memref.load %arg0[%c0_41, %c3_42] : memref<2x4xf32, #tpu.memory_space<smem>>
    %70 = vector.broadcast %69 : f32 to vector<16x128xf32>
    %71 = arith.mulf %70, %68 : vector<16x128xf32>
    %72 = arith.addf %54, %71 : vector<16x128xf32>
    %c1_43 = arith.constant 1 : index
    %c3_44 = arith.constant 3 : index
    %73 = memref.load %arg0[%c1_43, %c3_44] : memref<2x4xf32, #tpu.memory_space<smem>>
    %74 = vector.broadcast %73 : f32 to vector<16x128xf32>
    %75 = arith.mulf %74, %68 : vector<16x128xf32>
    %76 = arith.addf %58, %75 : vector<16x128xf32>
    %c0_45 = arith.constant 0 : index
    %77 = memref.load %arg1[%c0_45] : memref<2xf32, #tpu.memory_space<smem>>
    %78 = vector.broadcast %77 : f32 to vector<16x128xf32>
    %79 = arith.mulf %78, %72 : vector<16x128xf32>
    %c0_46 = arith.constant 0 : index
    %c0_47 = arith.constant 0 : index
    %c0_48 = arith.constant 0 : index
    %80 = vector.load %arg6[%c0_46, %c0_47, %c0_48] : memref<2x16x128xf32, #tpu.memory_space<vmem>>, vector<1x16x128xf32>
    %81 = vector.shape_cast %80 : vector<1x16x128xf32> to vector<16x128xf32>
    %82 = vector.shape_cast %79 : vector<16x128xf32> to vector<1x16x128xf32>
    tpu.vector_store %arg6[%c0_46, %c0_47, %c0_48], %82 {strides = array<i32>} : memref<2x16x128xf32, #tpu.memory_space<vmem>>, vector<1x16x128xf32>,
    %c1_49 = arith.constant 1 : index
    %83 = memref.load %arg1[%c1_49] : memref<2xf32, #tpu.memory_space<smem>>
    %84 = vector.broadcast %83 : f32 to vector<16x128xf32>
    %85 = arith.mulf %84, %76 : vector<16x128xf32>
    %c1_50 = arith.constant 1 : index
    %c0_51 = arith.constant 0 : index
    %c0_52 = arith.constant 0 : index
    %86 = vector.load %arg6[%c1_50, %c0_51, %c0_52] : memref<2x16x128xf32, #tpu.memory_space<vmem>>, vector<1x16x128xf32>
    %87 = vector.shape_cast %86 : vector<1x16x128xf32> to vector<16x128xf32>
    %88 = vector.shape_cast %85 : vector<16x128xf32> to vector<1x16x128xf32>
    tpu.vector_store %arg6[%c1_50, %c0_51, %c0_52], %88 {strides = array<i32>} : memref<2x16x128xf32, #tpu.memory_space<vmem>>, vector<1x16x128xf32>,
    return
  }
}

</mosaic_0001>

<llo_original>
// kernel: tpu_custom_call.1
$region0: #{tpu_custom_call.1}
  #allocation0 [shape = 'u32[]', space=smem, size = 0x4, offset = 0x4, fixed_abs, tag = 'smem constant byte address 0x4 - core index']
  #allocation1 [shape = 'u32[144,128]{1,0:T(1,128)}', space=vmem, size = 0x12000, scoped, tag = 'internal scratch']
  %s0 = inlined_call_operand.hbm [shape: f32[2,4], index: 0, kind: input, shape index: {}]
  %s1 = inlined_call_operand.vmem [shape: f32[2], index: 1, kind: input, shape index: {}]
  %s2 = inlined_call_operand.hbm [shape: f32[16,128], index: 2, kind: input, shape index: {}]
  %s3 = inlined_call_operand.hbm [shape: f32[16,128], index: 3, kind: input, shape index: {}]
  %s4 = inlined_call_operand.hbm [shape: f32[4,128,128], index: 4, kind: input, shape index: {}]
  %s5 = inlined_call_operand.vmem [shape: f32[4,1,128], index: 5, kind: input, shape index: {}]
  %s6 = inlined_call_operand.hbm [shape: f32[2,16,128], index: 6, kind: output, shape index: {}]
  %s7 = sld [smem:[#allocation0]]
  $region54: #{tpu_custom_call.1} parent=0
    _
  %s9 = ssub.s32 1, %s7
  %s10 = scalar_select 0, %s9, %s7
  $region1: #{tpu_custom_call.1} parent=0
    #allocation2 [shape = 'u8[1024]{0}', space=smem, size = 0x400, scoped, tag = 'input window, operand 0, single buffered']
    #allocation3 [shape = 's32[1]{0}', space=sflag, size = 0x4, scoped, tag = 'scoped memory for tpu_custom_call.1']
    #allocation4 [shape = 's32[1]{0}', space=sflag, size = 0x4, scoped, tag = 'scoped memory for tpu_custom_call.1']
    #allocation5 [shape = 's32[1]{0}', space=sflag, size = 0x4, scoped, tag = 'scoped memory for tpu_custom_call.1']
    #allocation6 [shape = 's32[1]{0}', space=sflag, size = 0x4, scoped, tag = 'scoped memory for tpu_custom_call.1']
    #allocation7 [shape = 'u8[512]{0}', space=smem, size = 0x200, scoped, tag = 'input window, operand 1, single buffered']
    #allocation8 [shape = 'u8[8192]{0}', space=vmem, size = 0x2000, scoped, tag = 'input window, operand 2, single buffered']
    #allocation9 [shape = 'u8[8192]{0}', space=vmem, size = 0x2000, scoped, tag = 'input window, operand 3, single buffered']
    #allocation10 [shape = 's32[1]{0}', space=sflag, size = 0x4, scoped, tag = 'scoped memory for tpu_custom_call.1']
    #allocation11 [shape = 'u8[262144]{0}', space=vmem, size = 0x40000, scoped, tag = 'input window, operand 4, single buffered']
    #allocation12 [shape = 'u8[16384]{0}', space=vmem, size = 0x4000, scoped, tag = 'output window, operand 0, single buffered']
    %11 = vsyncpa [#allocation5], 0
    %12 = vsyncpa [#allocation6], 0
    %13 = vsyncpa [#allocation3], 0
    %14 = vsyncpa [#allocation10], 0
    %15 = vsyncpa [#allocation4], 0
    // Predicated region
    $region2: #{tpu_custom_call.1} parent=1 // pred_check
      _
    $region3: #{tpu_custom_call.1} parent=1 // pred_check_branch
      %17 = sbr.rel (0) target = $region5
    $region4: #{tpu_custom_call.1} parent=1 // pred_region
      %s19 = ssub.s32 32, 32
      %20 = vsyncadd [#allocation5], %s19
      %23 = dma.hbm_to_smem %s0, 32, [#allocation2], [#allocation5]
    $region5: #{tpu_custom_call.1} parent=1 // pred_fallthru
      _
    // Predicated region
    $region6: #{tpu_custom_call.1} parent=1 // pred_check
      _
    $region7: #{tpu_custom_call.1} parent=1 // pred_check_branch
      %25 = sbr.rel (0) target = $region9
    $region8: #{tpu_custom_call.1} parent=1 // pred_region
      %s27 = ssub.s32 16, 16
      %28 = vsyncadd [#allocation6], %s27
      %s30 = sshll.u32 %s1, 4
      %s31 = int_to_ptr.vmem [resolvable:$true] %s30
      %33 = dma.vmem_to_smem %s31, 16, [#allocation7], [#allocation6]
    $region9: #{tpu_custom_call.1} parent=1 // pred_fallthru
      _
    // Predicated region
    $region10: #{tpu_custom_call.1} parent=1 // pred_check
      _
    $region11: #{tpu_custom_call.1} parent=1 // pred_check_branch
      %35 = sbr.rel (0) target = $region13
    $region12: #{tpu_custom_call.1} parent=1 // pred_region
      %s37 = ssub.s32 256, 256
      %38 = vsyncadd [#allocation3], %s37
      %s39 = sshll.u32 [#allocation8], 4
      %s40 = int_to_ptr.vmem [resolvable:$true] %s39
      %45 = dma.hbm_to_vmem [thread:$0]  %s2, 256, %s40, [#allocation3], 128, 128, 8
    $region13: #{tpu_custom_call.1} parent=1 // pred_fallthru
      _
    // Predicated region
    $region14: #{tpu_custom_call.1} parent=1 // pred_check
      _
    $region15: #{tpu_custom_call.1} parent=1 // pred_check_branch
      %47 = sbr.rel (0) target = $region17
    $region16: #{tpu_custom_call.1} parent=1 // pred_region
      %s49 = ssub.s32 256, 256
      %50 = vsyncadd [#allocation10], %s49
      %s51 = sshll.u32 [#allocation9], 4
      %s52 = int_to_ptr.vmem [resolvable:$true] %s51
      %57 = dma.hbm_to_vmem [thread:$0]  %s3, 256, %s52, [#allocation10], 128, 128, 8
    $region17: #{tpu_custom_call.1} parent=1 // pred_fallthru
      _
    // Predicated region
    $region18: #{tpu_custom_call.1} parent=1 // pred_check
      _
    $region19: #{tpu_custom_call.1} parent=1 // pred_check_branch
      %59 = sbr.rel (0) target = $region21
    $region20: #{tpu_custom_call.1} parent=1 // pred_region
      %s61 = ssub.s32 8192, 8192
      %62 = vsyncadd [#allocation10], %s61
      %s63 = sshll.u32 [#allocation11], 4
      %s64 = int_to_ptr.vmem [resolvable:$true] %s63
      %69 = dma.hbm_to_vmem [thread:$0]  %s4, 8192, %s64, [#allocation10], 128, 128, 8
    $region21: #{tpu_custom_call.1} parent=1 // pred_fallthru
      _
    // Predicated region
    $region22: #{tpu_custom_call.1} parent=1 // pred_check
      _
    $region23: #{tpu_custom_call.1} parent=1 // pred_check_branch
      %71 = sbr.rel (0) target = $region25
    $region24: #{tpu_custom_call.1} parent=1 // pred_region
      _
    $region25: #{tpu_custom_call.1} parent=1 // pred_fallthru
      _
    // Predicated region
    $region26: #{tpu_custom_call.1} parent=1 // pred_check
      _
    $region27: #{tpu_custom_call.1} parent=1 // pred_check_branch
      %73 = sbr.rel (0) target = $region29
    $region28: #{tpu_custom_call.1} parent=1 // pred_region
      %74 = dma.done [#allocation5], 32
    $region29: #{tpu_custom_call.1} parent=1 // pred_fallthru
      _
    // Predicated region
    $region30: #{tpu_custom_call.1} parent=1 // pred_check
      _
    $region31: #{tpu_custom_call.1} parent=1 // pred_check_branch
      %76 = sbr.rel (0) target = $region33
    $region32: #{tpu_custom_call.1} parent=1 // pred_region
      %77 = dma.done [#allocation6], 16
    $region33: #{tpu_custom_call.1} parent=1 // pred_fallthru
      _
    // Predicated region
    $region34: #{tpu_custom_call.1} parent=1 // pred_check
      _
    $region35: #{tpu_custom_call.1} parent=1 // pred_check_branch
      %79 = sbr.rel (0) target = $region37
    $region36: #{tpu_custom_call.1} parent=1 // pred_region
      %80 = dma.done [#allocation3], 256
    $region37: #{tpu_custom_call.1} parent=1 // pred_fallthru
      _
    // Predicated region
    $region38: #{tpu_custom_call.1} parent=1 // pred_check
      _
    $region39: #{tpu_custom_call.1} parent=1 // pred_check_branch
      %82 = sbr.rel (0) target = $region41
    $region40: #{tpu_custom_call.1} parent=1 // pred_region
      %83 = dma.done [#allocation10], 256
    $region41: #{tpu_custom_call.1} parent=1 // pred_fallthru
      _
    // Predicated region
    $region42: #{tpu_custom_call.1} parent=1 // pred_check
      _
    $region43: #{tpu_custom_call.1} parent=1 // pred_check_branch
      %85 = sbr.rel (0) target = $region45
    $region44: #{tpu_custom_call.1} parent=1 // pred_region
      %86 = dma.done [#allocation10], 8192
    $region45: #{tpu_custom_call.1} parent=1 // pred_fallthru
      _
    %87 = sfence
    %v88 = vld [vmem:[#allocation9] sm:$0xff]
    %v89 = vld [vmem:[#allocation9 + $0x8] sm:$0xff]
    %v90 = vld [vmem:[#allocation8] sm:$0xff]
    %v91 = vld [vmem:[#allocation8 + $0x8] sm:$0xff]
    %v92 = vmul.f32 %v90, %v88
    %v93 = vmul.f32 %v91, %v89
    %v94 = vld [vmem:[#allocation11] sm:$0xff]
    %v95 = vld [vmem:[#allocation11 + $0x8] sm:$0xff]
    %v96 = vld [vmem:[#allocation11 + $0x10] sm:$0xff]
    %v97 = vld [vmem:[#allocation11 + $0x18] sm:$0xff]
    %v98 = vld [vmem:[#allocation11 + $0x20] sm:$0xff]
    %v99 = vld [vmem:[#allocation11 + $0x28] sm:$0xff]
    %v100 = vld [vmem:[#allocation11 + $0x30] sm:$0xff]
    %v101 = vld [vmem:[#allocation11 + $0x38] sm:$0xff]
    %v102 = vld [vmem:[#allocation11 + $0x40] sm:$0xff]
    %v103 = vld [vmem:[#allocation11 + $0x48] sm:$0xff]
    %v104 = vld [vmem:[#allocation11 + $0x50] sm:$0xff]
    %v105 = vld [vmem:[#allocation11 + $0x58] sm:$0xff]
    %v106 = vld [vmem:[#allocation11 + $0x60] sm:$0xff]
    %v107 = vld [vmem:[#allocation11 + $0x68] sm:$0xff]
    %v108 = vld [vmem:[#allocation11 + $0x70] sm:$0xff]
    %v109 = vld [vmem:[#allocation11 + $0x78] sm:$0xff]
    %v110 = vld [vmem:[%s5] sm:$0x1]
    %v112 = vlaneseq
    %v113 = vshrl.u32 %v112, 7
    %v114 = vsub.s32 0, %v113
    %v115 = vrot.slane %v110, %v114
    %117 = vmatprep.subr.mxu0 0.0
    %118 = vmatpush1.msra.mxu0 %v94
    %119 = vmatprep.subr.mxu0 0.0
    %120 = vmatpush1.msra.mxu0 %v95
    %121 = vmatprep.subr.mxu0 0.0
    %122 = vmatpush1.msra.mxu0 %v96
    %123 = vmatprep.subr.mxu0 0.0
    %124 = vmatpush1.msra.mxu0 %v97
    %125 = vmatprep.subr.mxu0 0.0
    %126 = vmatpush1.msra.mxu0 %v98
    %127 = vmatprep.subr.mxu0 0.0
    %128 = vmatpush1.msra.mxu0 %v99
    %129 = vmatprep.subr.mxu0 0.0
    %130 = vmatpush1.msra.mxu0 %v100
    %131 = vmatprep.subr.mxu0 0.0
    %132 = vmatpush1.msra.mxu0 %v101
    %133 = vmatprep.subr.mxu0 0.0
    %134 = vmatpush1.msra.mxu0 %v102
    %135 = vmatprep.subr.mxu0 0.0
    %136 = vmatpush1.msra.mxu0 %v103
    %137 = vmatprep.subr.mxu0 0.0
    %138 = vmatpush1.msra.mxu0 %v104
    %139 = vmatprep.subr.mxu0 0.0
    %140 = vmatpush1.msra.mxu0 %v105
    %141 = vmatprep.subr.mxu0 0.0
    %142 = vmatpush1.msra.mxu0 %v106
    %143 = vmatprep.subr.mxu0 0.0
    %144 = vmatpush1.msra.mxu0 %v107
    %145 = vmatprep.subr.mxu0 0.0
    %146 = vmatpush1.msra.mxu0 %v108
    %147 = vmatprep.subr.mxu0 0.0
    %148 = vmatpush1.msra.mxu0 %v109
    %149 = vmatprep.subr.mxu0 0.0
    %150 = vmatpush1.msra.mxu0 0.0
    %151 = vmatprep.subr.mxu0 0.0
    %152 = vmatpush1.msra.mxu0 0.0
    %153 = vmatprep.subr.mxu0 0.0
    %154 = vmatpush1.msra.mxu0 0.0
    %155 = vmatprep.subr.mxu0 0.0
    %156 = vmatpush1.msra.mxu0 0.0
    %157 = vmatprep.subr.mxu0 0.0
    %158 = vmatpush1.msra.mxu0 0.0
    %159 = vmatprep.subr.mxu0 0.0
    %160 = vmatpush1.msra.mxu0 0.0
    %161 = vmatprep.subr.mxu0 0.0
    %162 = vmatpush1.msra.mxu0 0.0
    %163 = vmatprep.subr.mxu0 0.0
    %164 = vmatpush1.msra.mxu0 0.0
    %165 = vmatprep.subr.mxu0 0.0
    %166 = vmatpush1.msra.mxu0 0.0
    %167 = vmatprep.subr.mxu0 0.0
    %168 = vmatpush1.msra.mxu0 0.0
    %169 = vmatprep.subr.mxu0 0.0
    %170 = vmatpush1.msra.mxu0 0.0
    %171 = vmatprep.subr.mxu0 0.0
    %172 = vmatpush1.msra.mxu0 0.0
    %173 = vmatprep.subr.mxu0 0.0
    %174 = vmatpush1.msra.mxu0 0.0
    %175 = vmatprep.subr.mxu0 0.0
    %176 = vmatpush1.msra.mxu0 0.0
    %177 = vmatprep.subr.mxu0 0.0
    %178 = vmatpush1.msra.mxu0 0.0
    %179 = vmatprep.subr.mxu0 0.0
    %180 = vmatpush1.msra.mxu0 0.0
    %181 = vmatprep.mubr.f32.mxu0 0.0
    %182 = vmatmul.mubr.f32.gmra.mrb[0].mxu0 %v92
    %v183 = vpop.f32.mrb[0].mxu0
    %v184 = vadd.f32 %v115, %v183
    %v185 = vpop.f32.mrb[0].mxu0
    %186 = vmatprep.mubr.f32.mxu0 0.0
    %187 = vmatmul.mubr.f32.gmra.mrb[0].mxu0 %v93
    %v188 = vpop.f32.mrb[0].mxu0
    %v189 = vadd.f32 %v115, %v188
    %v190 = vpop.f32.mrb[0].mxu0
    %191 = vdwg.mxu0
    %v192 = vtanh.pop %v184
    %v193 = vtanh.pop %v189
    %v194 = vadd.f32 %v192, %v92
    %v195 = vadd.f32 %v193, %v93
    %v196 = vmul.f32 %v194, %v88
    %v197 = vmul.f32 %v195, %v89
    %s198 = sld [smem:[#allocation2]]
    %v199 = vstv %s198
    %v200 = vmul.f32 %v199, %v196
    %v201 = vmul.f32 %v199, %v197
    %v202 = vadd.f32 %v200, 0.0
    %v203 = vadd.f32 %v201, 0.0
    %s204 = sld [smem:[#allocation2 + $0x80]]
    %v205 = vstv %s204
    %v206 = vmul.f32 %v205, %v196
    %v207 = vmul.f32 %v205, %v197
    %v208 = vadd.f32 %v206, 0.0
    %v209 = vadd.f32 %v207, 0.0
    %s210 = scalar_lea.vmem [#allocation11], 128
    %v211 = vld [vmem:[%s210] sm:$0xff]
    %v212 = vld [vmem:[%s210 + $0x8] sm:$0xff]
    %v213 = vld [vmem:[%s210 + $0x10] sm:$0xff]
    %v214 = vld [vmem:[%s210 + $0x18] sm:$0xff]
    %v215 = vld [vmem:[%s210 + $0x20] sm:$0xff]
    %v216 = vld [vmem:[%s210 + $0x28] sm:$0xff]
    %v217 = vld [vmem:[%s210 + $0x30] sm:$0xff]
    %v218 = vld [vmem:[%s210 + $0x38] sm:$0xff]
    %v219 = vld [vmem:[%s210 + $0x40] sm:$0xff]
    %v220 = vld [vmem:[%s210 + $0x48] sm:$0xff]
    %v221 = vld [vmem:[%s210 + $0x50] sm:$0xff]
    %v222 = vld [vmem:[%s210 + $0x58] sm:$0xff]
    %v223 = vld [vmem:[%s210 + $0x60] sm:$0xff]
    %v224 = vld [vmem:[%s210 + $0x68] sm:$0xff]
    %v225 = vld [vmem:[%s210 + $0x70] sm:$0xff]
    %v226 = vld [vmem:[%s210 + $0x78] sm:$0xff]
    %s227 = scalar_lea.vmem %s5, 1
    %v228 = vld [vmem:[%s227] sm:$0x1]
    %v230 = vlaneseq
    %v231 = vshrl.u32 %v230, 7
    %v232 = vsub.s32 0, %v231
    %v233 = vrot.slane %v228, %v232
    %235 = vmatprep.subr.mxu0 0.0
    %236 = vmatpush1.msra.mxu0 %v211
    %237 = vmatprep.subr.mxu0 0.0
    %238 = vmatpush1.msra.mxu0 %v212
    %239 = vmatprep.subr.mxu0 0.0
    %240 = vmatpush1.msra.mxu0 %v213
    %241 = vmatprep.subr.mxu0 0.0
    %242 = vmatpush1.msra.mxu0 %v214
    %243 = vmatprep.subr.mxu0 0.0
    %244 = vmatpush1.msra.mxu0 %v215
    %245 = vmatprep.subr.mxu0 0.0
    %246 = vmatpush1.msra.mxu0 %v216
    %247 = vmatprep.subr.mxu0 0.0
    %248 = vmatpush1.msra.mxu0 %v217
    %249 = vmatprep.subr.mxu0 0.0
    %250 = vmatpush1.msra.mxu0 %v218
    %251 = vmatprep.subr.mxu0 0.0
    %252 = vmatpush1.msra.mxu0 %v219
    %253 = vmatprep.subr.mxu0 0.0
    %254 = vmatpush1.msra.mxu0 %v220
    %255 = vmatprep.subr.mxu0 0.0
    %256 = vmatpush1.msra.mxu0 %v221
    %257 = vmatprep.subr.mxu0 0.0
    %258 = vmatpush1.msra.mxu0 %v222
    %259 = vmatprep.subr.mxu0 0.0
    %260 = vmatpush1.msra.mxu0 %v223
    %261 = vmatprep.subr.mxu0 0.0
    %262 = vmatpush1.msra.mxu0 %v224
    %263 = vmatprep.subr.mxu0 0.0
    %264 = vmatpush1.msra.mxu0 %v225
    %265 = vmatprep.subr.mxu0 0.0
    %266 = vmatpush1.msra.mxu0 %v226
    %267 = vmatprep.subr.mxu0 0.0
    %268 = vmatpush1.msra.mxu0 0.0
    %269 = vmatprep.subr.mxu0 0.0
    %270 = vmatpush1.msra.mxu0 0.0
    %271 = vmatprep.subr.mxu0 0.0
    %272 = vmatpush1.msra.mxu0 0.0
    %273 = vmatprep.subr.mxu0 0.0
    %274 = vmatpush1.msra.mxu0 0.0
    %275 = vmatprep.subr.mxu0 0.0
    %276 = vmatpush1.msra.mxu0 0.0
    %277 = vmatprep.subr.mxu0 0.0
    %278 = vmatpush1.msra.mxu0 0.0
    %279 = vmatprep.subr.mxu0 0.0
    %280 = vmatpush1.msra.mxu0 0.0
    %281 = vmatprep.subr.mxu0 0.0
    %282 = vmatpush1.msra.mxu0 0.0
    %283 = vmatprep.subr.mxu0 0.0
    %284 = vmatpush1.msra.mxu0 0.0
    %285 = vmatprep.subr.mxu0 0.0
    %286 = vmatpush1.msra.mxu0 0.0
    %287 = vmatprep.subr.mxu0 0.0
    %288 = vmatpush1.msra.mxu0 0.0
    %289 = vmatprep.subr.mxu0 0.0
    %290 = vmatpush1.msra.mxu0 0.0
    %291 = vmatprep.subr.mxu0 0.0
    %292 = vmatpush1.msra.mxu0 0.0
    %293 = vmatprep.subr.mxu0 0.0
    %294 = vmatpush1.msra.mxu0 0.0
    %295 = vmatprep.subr.mxu0 0.0
    %296 = vmatpush1.msra.mxu0 0.0
    %297 = vmatprep.subr.mxu0 0.0
    %298 = vmatpush1.msra.mxu0 0.0
    %299 = vmatprep.mubr.f32.mxu0 0.0
    %300 = vmatmul.mubr.f32.gmra.mrb[0].mxu0 %v196
    %v301 = vpop.f32.mrb[0].mxu0
    %v302 = vadd.f32 %v233, %v301
    %v303 = vpop.f32.mrb[0].mxu0
    %304 = vmatprep.mubr.f32.mxu0 0.0
    %305 = vmatmul.mubr.f32.gmra.mrb[0].mxu0 %v197
    %v306 = vpop.f32.mrb[0].mxu0
    %v307 = vadd.f32 %v233, %v306
    %v308 = vpop.f32.mrb[0].mxu0
    %309 = vdwg.mxu0
    %v310 = vtanh.pop %v302
    %v311 = vtanh.pop %v307
    %v312 = vadd.f32 %v310, %v196
    %v313 = vadd.f32 %v311, %v197
    %v314 = vmul.f32 %v312, %v88
    %v315 = vmul.f32 %v313, %v89
    %s316 = sld [smem:[#allocation2 + $0x1]]
    %v317 = vstv %s316
    %v318 = vmul.f32 %v317, %v314
    %v319 = vmul.f32 %v317, %v315
    %v320 = vadd.f32 %v202, %v318
    %v321 = vadd.f32 %v203, %v319
    %s322 = sld [smem:[#allocation2 + $0x81]]
    %v323 = vstv %s322
    %v324 = vmul.f32 %v323, %v314
    %v325 = vmul.f32 %v323, %v315
    %v326 = vadd.f32 %v208, %v324
    %v327 = vadd.f32 %v209, %v325
    %s328 = scalar_lea.vmem [#allocation11], 256
    %v329 = vld [vmem:[%s328] sm:$0xff]
    %v330 = vld [vmem:[%s328 + $0x8] sm:$0xff]
    %v331 = vld [vmem:[%s328 + $0x10] sm:$0xff]
    %v332 = vld [vmem:[%s328 + $0x18] sm:$0xff]
    %v333 = vld [vmem:[%s328 + $0x20] sm:$0xff]
    %v334 = vld [vmem:[%s328 + $0x28] sm:$0xff]
    %v335 = vld [vmem:[%s328 + $0x30] sm:$0xff]
    %v336 = vld [vmem:[%s328 + $0x38] sm:$0xff]
    %v337 = vld [vmem:[%s328 + $0x40] sm:$0xff]
    %v338 = vld [vmem:[%s328 + $0x48] sm:$0xff]
    %v339 = vld [vmem:[%s328 + $0x50] sm:$0xff]
    %v340 = vld [vmem:[%s328 + $0x58] sm:$0xff]
    %v341 = vld [vmem:[%s328 + $0x60] sm:$0xff]
    %v342 = vld [vmem:[%s328 + $0x68] sm:$0xff]
    %v343 = vld [vmem:[%s328 + $0x70] sm:$0xff]
    %v344 = vld [vmem:[%s328 + $0x78] sm:$0xff]
    %s345 = scalar_lea.vmem %s5, 2
    %v346 = vld [vmem:[%s345] sm:$0x1]
    %v348 = vlaneseq
    %v349 = vshrl.u32 %v348, 7
    %v350 = vsub.s32 0, %v349
    %v351 = vrot.slane %v346, %v350
    %353 = vmatprep.subr.mxu0 0.0
    %354 = vmatpush1.msra.mxu0 %v329
    %355 = vmatprep.subr.mxu0 0.0
    %356 = vmatpush1.msra.mxu0 %v330
    %357 = vmatprep.subr.mxu0 0.0
    %358 = vmatpush1.msra.mxu0 %v331
    %359 = vmatprep.subr.mxu0 0.0
    %360 = vmatpush1.msra.mxu0 %v332
    %361 = vmatprep.subr.mxu0 0.0
    %362 = vmatpush1.msra.mxu0 %v333
    %363 = vmatprep.subr.mxu0 0.0
    %364 = vmatpush1.msra.mxu0 %v334
    %365 = vmatprep.subr.mxu0 0.0
    %366 = vmatpush1.msra.mxu0 %v335
    %367 = vmatprep.subr.mxu0 0.0
    %368 = vmatpush1.msra.mxu0 %v336
    %369 = vmatprep.subr.mxu0 0.0
    %370 = vmatpush1.msra.mxu0 %v337
    %371 = vmatprep.subr.mxu0 0.0
    %372 = vmatpush1.msra.mxu0 %v338
    %373 = vmatprep.subr.mxu0 0.0
    %374 = vmatpush1.msra.mxu0 %v339
    %375 = vmatprep.subr.mxu0 0.0
    %376 = vmatpush1.msra.mxu0 %v340
    %377 = vmatprep.subr.mxu0 0.0
    %378 = vmatpush1.msra.mxu0 %v341
    %379 = vmatprep.subr.mxu0 0.0
    %380 = vmatpush1.msra.mxu0 %v342
    %381 = vmatprep.subr.mxu0 0.0
    %382 = vmatpush1.msra.mxu0 %v343
    %383 = vmatprep.subr.mxu0 0.0
    %384 = vmatpush1.msra.mxu0 %v344
    %385 = vmatprep.subr.mxu0 0.0
    %386 = vmatpush1.msra.mxu0 0.0
    %387 = vmatprep.subr.mxu0 0.0
    %388 = vmatpush1.msra.mxu0 0.0
    %389 = vmatprep.subr.mxu0 0.0
    %390 = vmatpush1.msra.mxu0 0.0
    %391 = vmatprep.subr.mxu0 0.0
    %392 = vmatpush1.msra.mxu0 0.0
    %393 = vmatprep.subr.mxu0 0.0
    %394 = vmatpush1.msra.mxu0 0.0
    %395 = vmatprep.subr.mxu0 0.0
    %396 = vmatpush1.msra.mxu0 0.0
    %397 = vmatprep.subr.mxu0 0.0
    %398 = vmatpush1.msra.mxu0 0.0
    %399 = vmatprep.subr.mxu0 0.0
    %400 = vmatpush1.msra.mxu0 0.0
    %401 = vmatprep.subr.mxu0 0.0
    %402 = vmatpush1.msra.mxu0 0.0
    %403 = vmatprep.subr.mxu0 0.0
    %404 = vmatpush1.msra.mxu0 0.0
    %405 = vmatprep.subr.mxu0 0.0
    %406 = vmatpush1.msra.mxu0 0.0
    %407 = vmatprep.subr.mxu0 0.0
    %408 = vmatpush1.msra.mxu0 0.0
    %409 = vmatprep.subr.mxu0 0.0
    %410 = vmatpush1.msra.mxu0 0.0
    %411 = vmatprep.subr.mxu0 0.0
    %412 = vmatpush1.msra.mxu0 0.0
    %413 = vmatprep.subr.mxu0 0.0
    %414 = vmatpush1.msra.mxu0 0.0
    %415 = vmatprep.subr.mxu0 0.0
    %416 = vmatpush1.msra.mxu0 0.0
    %417 = vmatprep.mubr.f32.mxu0 0.0
    %418 = vmatmul.mubr.f32.gmra.mrb[0].mxu0 %v314
    %v419 = vpop.f32.mrb[0].mxu0
    %v420 = vadd.f32 %v351, %v419
    %v421 = vpop.f32.mrb[0].mxu0
    %422 = vmatprep.mubr.f32.mxu0 0.0
    %423 = vmatmul.mubr.f32.gmra.mrb[0].mxu0 %v315
    %v424 = vpop.f32.mrb[0].mxu0
    %v425 = vadd.f32 %v351, %v424
    %v426 = vpop.f32.mrb[0].mxu0
    %427 = vdwg.mxu0
    %v428 = vtanh.pop %v420
    %v429 = vtanh.pop %v425
    %v430 = vadd.f32 %v428, %v314
    %v431 = vadd.f32 %v429, %v315
    %v432 = vmul.f32 %v430, %v88
    %v433 = vmul.f32 %v431, %v89
    %s434 = sld [smem:[#allocation2 + $0x2]]
    %v435 = vstv %s434
    %v436 = vmul.f32 %v435, %v432
    %v437 = vmul.f32 %v435, %v433
    %v438 = vadd.f32 %v320, %v436
    %v439 = vadd.f32 %v321, %v437
    %s440 = sld [smem:[#allocation2 + $0x82]]
    %v441 = vstv %s440
    %v442 = vmul.f32 %v441, %v432
    %v443 = vmul.f32 %v441, %v433
    %v444 = vadd.f32 %v326, %v442
    %v445 = vadd.f32 %v327, %v443
    %s446 = scalar_lea.vmem [#allocation11], 384
    %v447 = vld [vmem:[%s446] sm:$0xff]
    %v448 = vld [vmem:[%s446 + $0x8] sm:$0xff]
    %v449 = vld [vmem:[%s446 + $0x10] sm:$0xff]
    %v450 = vld [vmem:[%s446 + $0x18] sm:$0xff]
    %v451 = vld [vmem:[%s446 + $0x20] sm:$0xff]
    %v452 = vld [vmem:[%s446 + $0x28] sm:$0xff]
    %v453 = vld [vmem:[%s446 + $0x30] sm:$0xff]
    %v454 = vld [vmem:[%s446 + $0x38] sm:$0xff]
    %v455 = vld [vmem:[%s446 + $0x40] sm:$0xff]
    %v456 = vld [vmem:[%s446 + $0x48] sm:$0xff]
    %v457 = vld [vmem:[%s446 + $0x50] sm:$0xff]
    %v458 = vld [vmem:[%s446 + $0x58] sm:$0xff]
    %v459 = vld [vmem:[%s446 + $0x60] sm:$0xff]
    %v460 = vld [vmem:[%s446 + $0x68] sm:$0xff]
    %v461 = vld [vmem:[%s446 + $0x70] sm:$0xff]
    %v462 = vld [vmem:[%s446 + $0x78] sm:$0xff]
    %s463 = scalar_lea.vmem %s5, 3
    %v464 = vld [vmem:[%s463] sm:$0x1]
    %v466 = vlaneseq
    %v467 = vshrl.u32 %v466, 7
    %v468 = vsub.s32 0, %v467
    %v469 = vrot.slane %v464, %v468
    %471 = vmatprep.subr.mxu0 0.0
    %472 = vmatpush1.msra.mxu0 %v447
    %473 = vmatprep.subr.mxu0 0.0
    %474 = vmatpush1.msra.mxu0 %v448
    %475 = vmatprep.subr.mxu0 0.0
    %476 = vmatpush1.msra.mxu0 %v449
    %477 = vmatprep.subr.mxu0 0.0
    %478 = vmatpush1.msra.mxu0 %v450
    %479 = vmatprep.subr.mxu0 0.0
    %480 = vmatpush1.msra.mxu0 %v451
    %481 = vmatprep.subr.mxu0 0.0
    %482 = vmatpush1.msra.mxu0 %v452
    %483 = vmatprep.subr.mxu0 0.0
    %484 = vmatpush1.msra.mxu0 %v453
    %485 = vmatprep.subr.mxu0 0.0
    %486 = vmatpush1.msra.mxu0 %v454
    %487 = vmatprep.subr.mxu0 0.0
    %488 = vmatpush1.msra.mxu0 %v455
    %489 = vmatprep.subr.mxu0 0.0
    %490 = vmatpush1.msra.mxu0 %v456
    %491 = vmatprep.subr.mxu0 0.0
    %492 = vmatpush1.msra.mxu0 %v457
    %493 = vmatprep.subr.mxu0 0.0
    %494 = vmatpush1.msra.mxu0 %v458
    %495 = vmatprep.subr.mxu0 0.0
    %496 = vmatpush1.msra.mxu0 %v459
    %497 = vmatprep.subr.mxu0 0.0
    %498 = vmatpush1.msra.mxu0 %v460
    %499 = vmatprep.subr.mxu0 0.0
    %500 = vmatpush1.msra.mxu0 %v461
    %501 = vmatprep.subr.mxu0 0.0
    %502 = vmatpush1.msra.mxu0 %v462
    %503 = vmatprep.subr.mxu0 0.0
    %504 = vmatpush1.msra.mxu0 0.0
    %505 = vmatprep.subr.mxu0 0.0
    %506 = vmatpush1.msra.mxu0 0.0
    %507 = vmatprep.subr.mxu0 0.0
    %508 = vmatpush1.msra.mxu0 0.0
    %509 = vmatprep.subr.mxu0 0.0
    %510 = vmatpush1.msra.mxu0 0.0
    %511 = vmatprep.subr.mxu0 0.0
    %512 = vmatpush1.msra.mxu0 0.0
    %513 = vmatprep.subr.mxu0 0.0
    %514 = vmatpush1.msra.mxu0 0.0
    %515 = vmatprep.subr.mxu0 0.0
    %516 = vmatpush1.msra.mxu0 0.0
    %517 = vmatprep.subr.mxu0 0.0
    %518 = vmatpush1.msra.mxu0 0.0
    %519 = vmatprep.subr.mxu0 0.0
    %520 = vmatpush1.msra.mxu0 0.0
    %521 = vmatprep.subr.mxu0 0.0
    %522 = vmatpush1.msra.mxu0 0.0
    %523 = vmatprep.subr.mxu0 0.0
    %524 = vmatpush1.msra.mxu0 0.0
    %525 = vmatprep.subr.mxu0 0.0
    %526 = vmatpush1.msra.mxu0 0.0
    %527 = vmatprep.subr.mxu0 0.0
    %528 = vmatpush1.msra.mxu0 0.0
    %529 = vmatprep.subr.mxu0 0.0
    %530 = vmatpush1.msra.mxu0 0.0
    %531 = vmatprep.subr.mxu0 0.0
    %532 = vmatpush1.msra.mxu0 0.0
    %533 = vmatprep.subr.mxu0 0.0
    %534 = vmatpush1.msra.mxu0 0.0
    %535 = vmatprep.mubr.f32.mxu0 0.0
    %536 = vmatmul.mubr.f32.gmra.mrb[0].mxu0 %v432
    %v537 = vpop.f32.mrb[0].mxu0
    %v538 = vadd.f32 %v469, %v537
    %v539 = vpop.f32.mrb[0].mxu0
    %540 = vmatprep.mubr.f32.mxu0 0.0
    %541 = vmatmul.mubr.f32.gmra.mrb[0].mxu0 %v433
    %v542 = vpop.f32.mrb[0].mxu0
    %v543 = vadd.f32 %v469, %v542
    %v544 = vpop.f32.mrb[0].mxu0
    %545 = vdwg.mxu0
    %v546 = vtanh.pop %v538
    %v547 = vtanh.pop %v543
    %v548 = vadd.f32 %v546, %v432
    %v549 = vadd.f32 %v547, %v433
    %v550 = vmul.f32 %v548, %v88
    %v551 = vmul.f32 %v549, %v89
    %s552 = sld [smem:[#allocation2 + $0x3]]
    %v553 = vstv %s552
    %v554 = vmul.f32 %v553, %v550
    %v555 = vmul.f32 %v553, %v551
    %v556 = vadd.f32 %v438, %v554
    %v557 = vadd.f32 %v439, %v555
    %s558 = sld [smem:[#allocation2 + $0x83]]
    %v559 = vstv %s558
    %v560 = vmul.f32 %v559, %v550
    %v561 = vmul.f32 %v559, %v551
    %v562 = vadd.f32 %v444, %v560
    %v563 = vadd.f32 %v445, %v561
    %s564 = sld [smem:[#allocation7]]
    %v565 = vstv %s564
    %v566 = vmul.f32 %v565, %v556
    %v567 = vmul.f32 %v565, %v557
    %568 = vst [vmem:[#allocation12] sm:$0xff] %v566
    %569 = vst [vmem:[#allocation12 + $0x8] sm:$0xff] %v567
    %s570 = sld [smem:[#allocation7 + $0x1]]
    %v571 = vstv %s570
    %v572 = vmul.f32 %v571, %v562
    %v573 = vmul.f32 %v571, %v563
    %s574 = scalar_lea.vmem [#allocation12], 16
    %575 = vst [vmem:[%s574] sm:$0xff] %v572
    %576 = vst [vmem:[%s574 + $0x8] sm:$0xff] %v573
    // Predicated region
    $region46: #{tpu_custom_call.1} parent=1 // pred_check
      _
    $region47: #{tpu_custom_call.1} parent=1 // pred_check_branch
      %578 = sbr.rel (0) target = $region49
    $region48: #{tpu_custom_call.1} parent=1 // pred_region
      %s580 = ssub.s32 512, 512
      %581 = vsyncadd [#allocation4], %s580
      %s582 = sshll.u32 [#allocation12], 4
      %s583 = int_to_ptr.vmem [resolvable:$true] %s582
      %588 = dma.vmem_to_hbm [thread:$0]  %s583, 512, %s6, [#allocation4], 128, 128, 8
    $region49: #{tpu_custom_call.1} parent=1 // pred_fallthru
      _
    // Predicated region
    $region50: #{tpu_custom_call.1} parent=1 // pred_check
      _
    $region51: #{tpu_custom_call.1} parent=1 // pred_check_branch
      %590 = sbr.rel (0) target = $region53
    $region52: #{tpu_custom_call.1} parent=1 // pred_region
      %591 = dma.done [#allocation4], 512
    $region53: #{tpu_custom_call.1} parent=1 // pred_fallthru
      _
    %592 = vsyncpa [#allocation3], 1
    %593 = vsyncpa [#allocation10], 1
    %594 = vsyncpa [#allocation4], 1
    %595 = vsyncpa [#allocation5], 1
    %596 = vsyncpa [#allocation6], 1

</llo_original>
